<compile_context>
chip_gen: v5e
topology: v5e:2x2
jax: 0.10.0
libtpu: 0.0.40
codegen_flags: <defaults>
</compile_context>

<pallas_src>
import functools

import jax
import jax.numpy as jnp
from jax.experimental import pallas as pl
from jax.experimental.pallas import tpu as pltpu


def _round_up(x: int, m: int) -> int:
    return ((x + m - 1) // m) * m


def _pick_batch_tile(batch: int, requested: int) -> int:
    """Batch tile: multiple of 16 (bf16 sublane packing); >=2 grid steps when batch allows."""
    b16 = _round_up(max(batch, 1), 16)
    tile = min(_round_up(requested, 16), b16)
    # v7x has 2 TensorCores per chip: give the "parallel" batch axis >= 2 steps if possible.
    if b16 >= 32 and tile > b16 // 2:
        tile = (b16 // 2) // 16 * 16
    return max(tile, 16)


def _ffnn_fused_kernel(*refs, n_layers: int):
    """refs = (x_ref, w0, b0, w1, b1, ..., w_{L-1}, b_{L-1}, out_ref)

    x_ref : [TB, D0]        f32  (original dtype; cast to bf16 in-VMEM)
    w_i   : [D_i, D_{i+1}]  bf16 (transposed vs torch nn.Linear.weight)
    b_i   : [1, D_{i+1}]    f32
    out   : [TB, D_L]       bf16
    """
    x_ref = refs[0]
    out_ref = refs[-1]
    h = x_ref[...].astype(jnp.bfloat16)               # cast in VMEM; only one HBM read of x
    for i in range(n_layers):
        w_ref = refs[1 + 2 * i]
        b_ref = refs[2 + 2 * i]
        acc = jnp.dot(h, w_ref[...], preferred_element_type=jnp.float32)  # MXU, f32 acc
        acc = acc + b_ref[...]                        # bias add in f32
        if i < n_layers - 1:
            acc = jnp.maximum(acc, 0.0)               # ReLU in f32
            # Dropout(p=0.2) -> identity at inference.
            h = acc.astype(jnp.bfloat16)              # bf16 for the next MXU matmul
        else:
            out_ref[...] = acc.astype(out_ref.dtype)  # bf16 store (f32 accumulation inside)


def ffnn_forward(x, params, input_size, num_classes, *, batch_tile=256):
    """Fused FFNN forward.  `params` = list of (w [in, out] f32, b [out] f32)."""
    n_layers = len(params)

    # Flatten exactly like x.view(-1, input_size).
    x2 = x.reshape(-1, input_size)
    B = x2.shape[0]

    # Lane-dense (multiple-of-128) feature widths at every layer boundary.
    d_pad = [_round_up(input_size, 128)] + [_round_up(w.shape[1], 128) for w, _ in params]

    tile = _pick_batch_tile(B, batch_tile)
    Bp = _round_up(B, tile)

    # Only pad x when necessary (input_size=1024 is already lane-aligned, so for a
    # tile-divisible batch x goes straight into the kernel with zero extra HBM passes).
    if Bp != B or d_pad[0] != input_size:
        xp = jnp.zeros((Bp, d_pad[0]), x2.dtype).at[:B, :input_size].set(x2)
    else:
        xp = x2

    flat_args = [xp]
    in_specs = [pl.BlockSpec((tile, d_pad[0]), lambda i: (i, 0))]
    for li, (w, b) in enumerate(params):
        din, dout = w.shape
        w_p = jnp.zeros((d_pad[li], d_pad[li + 1]), jnp.bfloat16)
        w_p = w_p.at[:din, :dout].set(w.astype(jnp.bfloat16))
        b_p = jnp.zeros((1, d_pad[li + 1]), jnp.float32).at[0, :dout].set(b)
        flat_args += [w_p, b_p]
        # Constant index_map -> operand is resident across grid steps; single-buffered.
        in_specs += [
            pl.BlockSpec((d_pad[li], d_pad[li + 1]), lambda i: (0, 0),
                         pipeline_mode=pl.Buffered(1)),
            pl.BlockSpec((1, d_pad[li + 1]), lambda i: (0, 0),
                         pipeline_mode=pl.Buffered(1)),
        ]

    # VMEM budget: double-buffered x/out tiles + single-buffered resident weights/biases.
    x_tile_bytes = tile * d_pad[0] * x2.dtype.itemsize
    out_tile_bytes = tile * d_pad[-1] * 2                      # bf16 logits
    wb_bytes = sum(d_pad[i] * d_pad[i + 1] * 2 + d_pad[i + 1] * 4 for i in range(n_layers))
    vmem_needed = 2 * (x_tile_bytes + out_tile_bytes) + wb_bytes
    cparams = dict(dimension_semantics=("parallel",))          # batch tiles are independent
    if vmem_needed > (12 << 20):                               # above v5e's 16 MiB scoped default
        cparams["vmem_limit_bytes"] = min(int(vmem_needed * 3 // 2), 60 << 20)

    kernel = functools.partial(_ffnn_fused_kernel, n_layers=n_layers)
    out_p = pl.pallas_call(
        kernel,
        out_shape=jax.ShapeDtypeStruct((Bp, d_pad[-1]), jnp.bfloat16),
        grid_spec=pltpu.PrefetchScalarGridSpec(
            num_scalar_prefetch=0,
            grid=(Bp // tile,),
            in_specs=in_specs,
            out_specs=pl.BlockSpec((tile, d_pad[-1]), lambda i: (i, 0)),
        ),
        compiler_params=pltpu.CompilerParams(**cparams),
    )(*flat_args)

    # Slice back to the logical logits; return f32 to match the torch module's output dtype.
    return out_p[:B, :num_classes].astype(jnp.float32)


def init_ffnn_params(key, input_size, hidden_layers, num_classes):
    """nn.Linear-style init (uniform +/- 1/sqrt(fan_in)); weights stored [in, out]."""
    params = []
    prev = input_size
    for out in list(hidden_layers) + [num_classes]:
        key, kw, kb = jax.random.split(key, 3)
        bound = 1.0 / (prev ** 0.5)
        w = jax.random.uniform(kw, (prev, out), jnp.float32, -bound, bound)
        b = jax.random.uniform(kb, (out,), jnp.float32, -bound, bound)
        params.append((w, b))
        prev = out
    return params


def _reference_forward(x, params, input_size):
    """Plain-JAX reference with identical numerics (bf16 operands, f32 accumulation)."""
    h = x.reshape(-1, input_size).astype(jnp.bfloat16)
    out = None
    for idx, (w, b) in enumerate(params):
        acc = jnp.dot(h, w.astype(jnp.bfloat16),
                      preferred_element_type=jnp.float32) + b[None, :]
        if idx != len(params) - 1:
            h = jnp.maximum(acc, 0.0).astype(jnp.bfloat16)
        else:
            out = acc.astype(jnp.bfloat16).astype(jnp.float32)   # match bf16 logit store
    return out


if __name__ == "__main__":
    # x is [B, C, H, W] = [2, 4, 16, 16] -> input_size = 4 * 16 * 16 = 1024.
    B, C, H, W = 2, 4, 16, 16
    input_size = C * H * W
    hidden_layers = [128, 64]
    num_classes = 10

    key = jax.random.PRNGKey(0)
    key, kx = jax.random.split(key)
    x = jax.random.normal(kx, (B, C, H, W), dtype=jnp.float32)
    params = init_ffnn_params(key, input_size, hidden_layers, num_classes)

    fwd = jax.jit(functools.partial(
        ffnn_forward, input_size=input_size, num_classes=num_classes))
    out = jax.block_until_ready(fwd(x, params))
    assert out.shape == (B, num_classes), out.shape
    assert out.dtype == jnp.float32

    ref = _reference_forward(x, params, input_size)
    assert jnp.allclose(out, ref, atol=2e-2, rtol=2e-2), \
        float(jnp.max(jnp.abs(out - ref)))

    # Exercise the multi-step grid + batch-padding path as well (B=40, tile=16 -> 3 steps).
    B2 = 40
    key, kx2 = jax.random.split(key)
    x_big = jax.random.normal(kx2, (B2, C, H, W), dtype=jnp.float32)
    fwd_tiled = jax.jit(functools.partial(
        ffnn_forward, input_size=input_size, num_classes=num_classes, batch_tile=16))
    out_big = jax.block_until_ready(fwd_tiled(x_big, params))
    ref_big = _reference_forward(x_big, params, input_size)
    assert out_big.shape == (B2, num_classes), out_big.shape
    assert jnp.allclose(out_big, ref_big, atol=2e-2, rtol=2e-2), \
        float(jnp.max(jnp.abs(out_big - ref_big)))

    print("KERNEL_OK")
</pallas_src>

<mosaic_0001>
module attributes {stable_mosaic.version = 11 : i64} {
  func.func @_ffnn_fused_kernel(%arg0: i32, %arg1: memref<16x1024xf32, #tpu.memory_space<vmem>>, %arg2: memref<1024x128xbf16, #tpu.memory_space<vmem>>, %arg3: memref<1x128xf32, #tpu.memory_space<vmem>>, %arg4: memref<128x128xbf16, #tpu.memory_space<vmem>>, %arg5: memref<1x128xf32, #tpu.memory_space<vmem>>, %arg6: memref<128x128xbf16, #tpu.memory_space<vmem>>, %arg7: memref<1x128xf32, #tpu.memory_space<vmem>>, %arg8: memref<16x128xbf16, #tpu.memory_space<vmem>>) attributes {dimension_semantics = [#tpu.dimension_semantics<parallel>], iteration_bounds = array<i64: 1>, scalar_prefetch = 0 : i64, scratch_operands = 0 : i64, tpu.core_type = #tpu.core_type<tc>, window_params = [{transform_indices = @transform_0, window_bounds = array<i64: 16, 1024>}, {pipeline_mode = #tpu.pipeline_mode<synchronous>, transform_indices = @transform_1, window_bounds = array<i64: 1024, 128>}, {pipeline_mode = #tpu.pipeline_mode<synchronous>, transform_indices = @transform_2, window_bounds = array<i64: 1, 128>}, {pipeline_mode = #tpu.pipeline_mode<synchronous>, transform_indices = @transform_3, window_bounds = array<i64: 128, 128>}, {pipeline_mode = #tpu.pipeline_mode<synchronous>, transform_indices = @transform_4, window_bounds = array<i64: 1, 128>}, {pipeline_mode = #tpu.pipeline_mode<synchronous>, transform_indices = @transform_5, window_bounds = array<i64: 128, 128>}, {pipeline_mode = #tpu.pipeline_mode<synchronous>, transform_indices = @transform_6, window_bounds = array<i64: 1, 128>}, {transform_indices = @transform_7, window_bounds = array<i64: 16, 128>}]} {
    %c0 = arith.constant 0 : index
    %c0_0 = arith.constant 0 : index
    %0 = vector.load %arg1[%c0, %c0_0] : memref<16x1024xf32, #tpu.memory_space<vmem>>, vector<16x1024xf32>
    %1 = arith.truncf %0 : vector<16x1024xf32> to vector<16x1024xbf16>
    %c0_1 = arith.constant 0 : index
    %c0_2 = arith.constant 0 : index
    %2 = vector.load %arg2[%c0_1, %c0_2] : memref<1024x128xbf16, #tpu.memory_space<vmem>>, vector<1024x128xbf16>
    %cst = arith.constant dense<0.000000e+00> : vector<16x128xf32>
    %3 = tpu.matmul %1, %2, %cst {dimension_numbers = #tpu.dot_dimension_numbers<[1], [0], [0], [1], [0, 0, 1, 1], [], []>} : vector<16x1024xbf16>, vector<1024x128xbf16>, vector<16x128xf32> -> vector<16x128xf32>
    %c0_3 = arith.constant 0 : index
    %c0_4 = arith.constant 0 : index
    %4 = vector.load %arg3[%c0_3, %c0_4] : memref<1x128xf32, #tpu.memory_space<vmem>>, vector<1x128xf32>
    %5 = vector.broadcast %4 : vector<1x128xf32> to vector<16x128xf32>
    %6 = arith.addf %3, %5 : vector<16x128xf32>
    %cst_5 = arith.constant 0.000000e+00 : f32
    %7 = vector.broadcast %cst_5 : f32 to vector<16x128xf32>
    %8 = arith.maximumf %6, %7 : vector<16x128xf32>
    %9 = arith.truncf %8 : vector<16x128xf32> to vector<16x128xbf16>
    %c0_6 = arith.constant 0 : index
    %c0_7 = arith.constant 0 : index
    %10 = vector.load %arg4[%c0_6, %c0_7] : memref<128x128xbf16, #tpu.memory_space<vmem>>, vector<128x128xbf16>
    %cst_8 = arith.constant dense<0.000000e+00> : vector<16x128xf32>
    %11 = tpu.matmul %9, %10, %cst_8 {dimension_numbers = #tpu.dot_dimension_numbers<[1], [0], [0], [1], [0, 0, 1, 1], [], []>} : vector<16x128xbf16>, vector<128x128xbf16>, vector<16x128xf32> -> vector<16x128xf32>
    %c0_9 = arith.constant 0 : index
    %c0_10 = arith.constant 0 : index
    %12 = vector.load %arg5[%c0_9, %c0_10] : memref<1x128xf32, #tpu.memory_space<vmem>>, vector<1x128xf32>
    %13 = vector.broadcast %12 : vector<1x128xf32> to vector<16x128xf32>
    %14 = arith.addf %11, %13 : vector<16x128xf32>
    %cst_11 = arith.constant 0.000000e+00 : f32
    %15 = vector.broadcast %cst_11 : f32 to vector<16x128xf32>
    %16 = arith.maximumf %14, %15 : vector<16x128xf32>
    %17 = arith.truncf %16 : vector<16x128xf32> to vector<16x128xbf16>
    %c0_12 = arith.constant 0 : index
    %c0_13 = arith.constant 0 : index
    %18 = vector.load %arg6[%c0_12, %c0_13] : memref<128x128xbf16, #tpu.memory_space<vmem>>, vector<128x128xbf16>
    %cst_14 = arith.constant dense<0.000000e+00> : vector<16x128xf32>
    %19 = tpu.matmul %17, %18, %cst_14 {dimension_numbers = #tpu.dot_dimension_numbers<[1], [0], [0], [1], [0, 0, 1, 1], [], []>} : vector<16x128xbf16>, vector<128x128xbf16>, vector<16x128xf32> -> vector<16x128xf32>
    %c0_15 = arith.constant 0 : index
    %c0_16 = arith.constant 0 : index
    %20 = vector.load %arg7[%c0_15, %c0_16] : memref<1x128xf32, #tpu.memory_space<vmem>>, vector<1x128xf32>
    %21 = vector.broadcast %20 : vector<1x128xf32> to vector<16x128xf32>
    %22 = arith.addf %19, %21 : vector<16x128xf32>
    %23 = arith.truncf %22 : vector<16x128xf32> to vector<16x128xbf16>
    %c0_17 = arith.constant 0 : index
    %c0_18 = arith.constant 0 : index
    %24 = vector.load %arg8[%c0_17, %c0_18] : memref<16x128xbf16, #tpu.memory_space<vmem>>, vector<16x128xbf16>
    tpu.vector_store %arg8[%c0_17, %c0_18], %23 {strides = array<i32>} : memref<16x128xbf16, #tpu.memory_space<vmem>>, vector<16x128xbf16>,
    return
  }
  func.func @transform_0(%arg0: i32) -> (i32, i32) {
    %c0_i32 = arith.constant 0 : i32
    %c0_i32_0 = arith.constant 0 : i32
    return %arg0, %c0_i32 : i32, i32
  }
  func.func @transform_1(%arg0: i32) -> (i32, i32) {
    %c0_i32 = arith.constant 0 : i32
    %c0_i32_0 = arith.constant 0 : i32
    %c0_i32_1 = arith.constant 0 : i32
    return %c0_i32, %c0_i32_0 : i32, i32
  }
  func.func @transform_2(%arg0: i32) -> (i32, i32) {
    %c0_i32 = arith.constant 0 : i32
    %c0_i32_0 = arith.constant 0 : i32
    %c0_i32_1 = arith.constant 0 : i32
    return %c0_i32, %c0_i32_0 : i32, i32
  }
  func.func @transform_3(%arg0: i32) -> (i32, i32) {
    %c0_i32 = arith.constant 0 : i32
    %c0_i32_0 = arith.constant 0 : i32
    %c0_i32_1 = arith.constant 0 : i32
    return %c0_i32, %c0_i32_0 : i32, i32
  }
  func.func @transform_4(%arg0: i32) -> (i32, i32) {
    %c0_i32 = arith.constant 0 : i32
    %c0_i32_0 = arith.constant 0 : i32
    %c0_i32_1 = arith.constant 0 : i32
    return %c0_i32, %c0_i32_0 : i32, i32
  }
  func.func @transform_5(%arg0: i32) -> (i32, i32) {
    %c0_i32 = arith.constant 0 : i32
    %c0_i32_0 = arith.constant 0 : i32
    %c0_i32_1 = arith.constant 0 : i32
    return %c0_i32, %c0_i32_0 : i32, i32
  }
  func.func @transform_6(%arg0: i32) -> (i32, i32) {
    %c0_i32 = arith.constant 0 : i32
    %c0_i32_0 = arith.constant 0 : i32
    %c0_i32_1 = arith.constant 0 : i32
    return %c0_i32, %c0_i32_0 : i32, i32
  }
  func.func @transform_7(%arg0: i32) -> (i32, i32) {
    %c0_i32 = arith.constant 0 : i32
    %c0_i32_0 = arith.constant 0 : i32
    return %arg0, %c0_i32 : i32, i32
  }
}

</mosaic_0001>

<llo_original>
// kernel: ffnn_forward.1
$region0: #{ffnn_forward.1}
  #allocation0 [shape = 'u32[]', space=smem, size = 0x4, offset = 0x4, fixed_abs, tag = 'smem constant byte address 0x4 - core index']
  #allocation1 [shape = 'u32[72,128]{1,0:T(1,128)}', space=vmem, size = 0x9000, scoped, tag = 'internal scratch']
  %s0 = inlined_call_operand.vmem [shape: f32[16,1024], index: 0, kind: input, shape index: {}]
  %s1 = inlined_call_operand.vmem [shape: bf16[1024,128], index: 1, kind: input, shape index: {}]
  %s2 = inlined_call_operand.vmem [shape: f32[1,128], index: 2, kind: input, shape index: {}]
  %s3 = inlined_call_operand.vmem [shape: bf16[128,128], index: 3, kind: input, shape index: {}]
  %s4 = inlined_call_operand.vmem [shape: f32[1,128], index: 4, kind: input, shape index: {}]
  %s5 = inlined_call_operand.vmem [shape: bf16[128,128], index: 5, kind: input, shape index: {}]
  %s6 = inlined_call_operand.vmem [shape: f32[1,128], index: 6, kind: input, shape index: {}]
  %s7 = inlined_call_operand.vmem [shape: bf16[16,128], index: 7, kind: output, shape index: {}]
  %s8 = sld [smem:[#allocation0]]
  $region38: #{ffnn_forward.1} parent=0
    _
  %s10 = ssub.s32 1, %s8
  %s11 = scalar_select 0, %s10, %s8
  // Predicated region
  $region2: #{ffnn_forward.1} parent=0 // pred_check
    _
  $region3: #{ffnn_forward.1} parent=0 // pred_check_branch
    %13 = sbr.rel (0) target = $region5
  $region4: #{ffnn_forward.1} parent=0 // pred_region
    _
  $region5: #{ffnn_forward.1} parent=0 // pred_fallthru
    _
  // Predicated region
  $region6: #{ffnn_forward.1} parent=0 // pred_check
    _
  $region7: #{ffnn_forward.1} parent=0 // pred_check_branch
    %15 = sbr.rel (0) target = $region9
  $region8: #{ffnn_forward.1} parent=0 // pred_region
    _
  $region9: #{ffnn_forward.1} parent=0 // pred_fallthru
    _
  // Predicated region
  $region10: #{ffnn_forward.1} parent=0 // pred_check
    _
  $region11: #{ffnn_forward.1} parent=0 // pred_check_branch
    %17 = sbr.rel (0) target = $region13
  $region12: #{ffnn_forward.1} parent=0 // pred_region
    _
  $region13: #{ffnn_forward.1} parent=0 // pred_fallthru
    _
  // Predicated region
  $region14: #{ffnn_forward.1} parent=0 // pred_check
    _
  $region15: #{ffnn_forward.1} parent=0 // pred_check_branch
    %19 = sbr.rel (0) target = $region17
  $region16: #{ffnn_forward.1} parent=0 // pred_region
    _
  $region17: #{ffnn_forward.1} parent=0 // pred_fallthru
    _
  // Predicated region
  $region18: #{ffnn_forward.1} parent=0 // pred_check
    _
  $region19: #{ffnn_forward.1} parent=0 // pred_check_branch
    %21 = sbr.rel (0) target = $region21
  $region20: #{ffnn_forward.1} parent=0 // pred_region
    _
  $region21: #{ffnn_forward.1} parent=0 // pred_fallthru
    _
  // Predicated region
  $region22: #{ffnn_forward.1} parent=0 // pred_check
    _
  $region23: #{ffnn_forward.1} parent=0 // pred_check_branch
    %23 = sbr.rel (0) target = $region25
  $region24: #{ffnn_forward.1} parent=0 // pred_region
    _
  $region25: #{ffnn_forward.1} parent=0 // pred_fallthru
    _
  // Predicated region
  $region26: #{ffnn_forward.1} parent=0 // pred_check
    _
  $region27: #{ffnn_forward.1} parent=0 // pred_check_branch
    %25 = sbr.rel (0) target = $region29
  $region28: #{ffnn_forward.1} parent=0 // pred_region
    _
  $region29: #{ffnn_forward.1} parent=0 // pred_fallthru
    _
  %v26 = vld [vmem:[%s0] sm:$0xff]
  %v27 = vld [vmem:[%s0 + $0x8] sm:$0xff]
  %v28 = vld [vmem:[%s0 + $0x10] sm:$0xff]
  %v29 = vld [vmem:[%s0 + $0x18] sm:$0xff]
  %v30 = vld [vmem:[%s0 + $0x20] sm:$0xff]
  %v31 = vld [vmem:[%s0 + $0x28] sm:$0xff]
  %v32 = vld [vmem:[%s0 + $0x30] sm:$0xff]
  %v33 = vld [vmem:[%s0 + $0x38] sm:$0xff]
  %v34 = vld [vmem:[%s0 + $0x40] sm:$0xff]
  %v35 = vld [vmem:[%s0 + $0x48] sm:$0xff]
  %v36 = vld [vmem:[%s0 + $0x50] sm:$0xff]
  %v37 = vld [vmem:[%s0 + $0x58] sm:$0xff]
  %v38 = vld [vmem:[%s0 + $0x60] sm:$0xff]
  %v39 = vld [vmem:[%s0 + $0x68] sm:$0xff]
  %v40 = vld [vmem:[%s0 + $0x70] sm:$0xff]
  %v41 = vld [vmem:[%s0 + $0x78] sm:$0xff]
  %v42 = vpack.c.bf16 %v34, %v26
  %v43 = vpack.c.bf16 %v35, %v27
  %v44 = vpack.c.bf16 %v36, %v28
  %v45 = vpack.c.bf16 %v37, %v29
  %v46 = vpack.c.bf16 %v38, %v30
  %v47 = vpack.c.bf16 %v39, %v31
  %v48 = vpack.c.bf16 %v40, %v32
  %v49 = vpack.c.bf16 %v41, %v33
  %v50 = vld [vmem:[%s1] sm:$0xf]
  %v51 = vld [vmem:[%s1 + $0x4] sm:$0xf]
  %v52 = vld [vmem:[%s1 + $0x8] sm:$0xf]
  %v53 = vld [vmem:[%s1 + $0xc] sm:$0xf]
  %v54 = vld [vmem:[%s1 + $0x10] sm:$0xf]
  %v55 = vld [vmem:[%s1 + $0x14] sm:$0xf]
  %v56 = vld [vmem:[%s1 + $0x18] sm:$0xf]
  %v57 = vld [vmem:[%s1 + $0x1c] sm:$0xf]
  %v58 = vld [vmem:[%s1 + $0x20] sm:$0xf]
  %v59 = vld [vmem:[%s1 + $0x24] sm:$0xf]
  %v60 = vld [vmem:[%s1 + $0x28] sm:$0xf]
  %v61 = vld [vmem:[%s1 + $0x2c] sm:$0xf]
  %v62 = vld [vmem:[%s1 + $0x30] sm:$0xf]
  %v63 = vld [vmem:[%s1 + $0x34] sm:$0xf]
  %v64 = vld [vmem:[%s1 + $0x38] sm:$0xf]
  %v65 = vld [vmem:[%s1 + $0x3c] sm:$0xf]
  %v66 = vld [vmem:[%s1 + $0x40] sm:$0xf]
  %v67 = vld [vmem:[%s1 + $0x44] sm:$0xf]
  %v68 = vld [vmem:[%s1 + $0x48] sm:$0xf]
  %v69 = vld [vmem:[%s1 + $0x4c] sm:$0xf]
  %v70 = vld [vmem:[%s1 + $0x50] sm:$0xf]
  %v71 = vld [vmem:[%s1 + $0x54] sm:$0xf]
  %v72 = vld [vmem:[%s1 + $0x58] sm:$0xf]
  %v73 = vld [vmem:[%s1 + $0x5c] sm:$0xf]
  %v74 = vld [vmem:[%s1 + $0x60] sm:$0xf]
  %v75 = vld [vmem:[%s1 + $0x64] sm:$0xf]
  %v76 = vld [vmem:[%s1 + $0x68] sm:$0xf]
  %v77 = vld [vmem:[%s1 + $0x6c] sm:$0xf]
  %v78 = vld [vmem:[%s1 + $0x70] sm:$0xf]
  %v79 = vld [vmem:[%s1 + $0x74] sm:$0xf]
  %v80 = vld [vmem:[%s1 + $0x78] sm:$0xf]
  %v81 = vld [vmem:[%s1 + $0x7c] sm:$0xf]
  %v82 = vld [vmem:[%s1 + $0x80] sm:$0xf]
  %v83 = vld [vmem:[%s1 + $0x84] sm:$0xf]
  %v84 = vld [vmem:[%s1 + $0x88] sm:$0xf]
  %v85 = vld [vmem:[%s1 + $0x8c] sm:$0xf]
  %v86 = vld [vmem:[%s1 + $0x90] sm:$0xf]
  %v87 = vld [vmem:[%s1 + $0x94] sm:$0xf]
  %v88 = vld [vmem:[%s1 + $0x98] sm:$0xf]
  %v89 = vld [vmem:[%s1 + $0x9c] sm:$0xf]
  %v90 = vld [vmem:[%s1 + $0xa0] sm:$0xf]
  %v91 = vld [vmem:[%s1 + $0xa4] sm:$0xf]
  %v92 = vld [vmem:[%s1 + $0xa8] sm:$0xf]
  %v93 = vld [vmem:[%s1 + $0xac] sm:$0xf]
  %v94 = vld [vmem:[%s1 + $0xb0] sm:$0xf]
  %v95 = vld [vmem:[%s1 + $0xb4] sm:$0xf]
  %v96 = vld [vmem:[%s1 + $0xb8] sm:$0xf]
  %v97 = vld [vmem:[%s1 + $0xbc] sm:$0xf]
  %v98 = vld [vmem:[%s1 + $0xc0] sm:$0xf]
  %v99 = vld [vmem:[%s1 + $0xc4] sm:$0xf]
  %v100 = vld [vmem:[%s1 + $0xc8] sm:$0xf]
  %v101 = vld [vmem:[%s1 + $0xcc] sm:$0xf]
  %v102 = vld [vmem:[%s1 + $0xd0] sm:$0xf]
  %v103 = vld [vmem:[%s1 + $0xd4] sm:$0xf]
  %v104 = vld [vmem:[%s1 + $0xd8] sm:$0xf]
  %v105 = vld [vmem:[%s1 + $0xdc] sm:$0xf]
  %v106 = vld [vmem:[%s1 + $0xe0] sm:$0xf]
  %v107 = vld [vmem:[%s1 + $0xe4] sm:$0xf]
  %v108 = vld [vmem:[%s1 + $0xe8] sm:$0xf]
  %v109 = vld [vmem:[%s1 + $0xec] sm:$0xf]
  %v110 = vld [vmem:[%s1 + $0xf0] sm:$0xf]
  %v111 = vld [vmem:[%s1 + $0xf4] sm:$0xf]
  %v112 = vld [vmem:[%s1 + $0xf8] sm:$0xf]
  %v113 = vld [vmem:[%s1 + $0xfc] sm:$0xf]
  %v114 = vld [vmem:[%s1 + $0x100] sm:$0xf]
  %v115 = vld [vmem:[%s1 + $0x104] sm:$0xf]
  %v116 = vld [vmem:[%s1 + $0x108] sm:$0xf]
  %v117 = vld [vmem:[%s1 + $0x10c] sm:$0xf]
  %v118 = vld [vmem:[%s1 + $0x110] sm:$0xf]
  %v119 = vld [vmem:[%s1 + $0x114] sm:$0xf]
  %v120 = vld [vmem:[%s1 + $0x118] sm:$0xf]
  %v121 = vld [vmem:[%s1 + $0x11c] sm:$0xf]
  %v122 = vld [vmem:[%s1 + $0x120] sm:$0xf]
  %v123 = vld [vmem:[%s1 + $0x124] sm:$0xf]
  %v124 = vld [vmem:[%s1 + $0x128] sm:$0xf]
  %v125 = vld [vmem:[%s1 + $0x12c] sm:$0xf]
  %v126 = vld [vmem:[%s1 + $0x130] sm:$0xf]
  %v127 = vld [vmem:[%s1 + $0x134] sm:$0xf]
  %v128 = vld [vmem:[%s1 + $0x138] sm:$0xf]
  %v129 = vld [vmem:[%s1 + $0x13c] sm:$0xf]
  %v130 = vld [vmem:[%s1 + $0x140] sm:$0xf]
  %v131 = vld [vmem:[%s1 + $0x144] sm:$0xf]
  %v132 = vld [vmem:[%s1 + $0x148] sm:$0xf]
  %v133 = vld [vmem:[%s1 + $0x14c] sm:$0xf]
  %v134 = vld [vmem:[%s1 + $0x150] sm:$0xf]
  %v135 = vld [vmem:[%s1 + $0x154] sm:$0xf]
  %v136 = vld [vmem:[%s1 + $0x158] sm:$0xf]
  %v137 = vld [vmem:[%s1 + $0x15c] sm:$0xf]
  %v138 = vld [vmem:[%s1 + $0x160] sm:$0xf]
  %v139 = vld [vmem:[%s1 + $0x164] sm:$0xf]
  %v140 = vld [vmem:[%s1 + $0x168] sm:$0xf]
  %v141 = vld [vmem:[%s1 + $0x16c] sm:$0xf]
  %v142 = vld [vmem:[%s1 + $0x170] sm:$0xf]
  %v143 = vld [vmem:[%s1 + $0x174] sm:$0xf]
  %v144 = vld [vmem:[%s1 + $0x178] sm:$0xf]
  %v145 = vld [vmem:[%s1 + $0x17c] sm:$0xf]
  %v146 = vld [vmem:[%s1 + $0x180] sm:$0xf]
  %v147 = vld [vmem:[%s1 + $0x184] sm:$0xf]
  %v148 = vld [vmem:[%s1 + $0x188] sm:$0xf]
  %v149 = vld [vmem:[%s1 + $0x18c] sm:$0xf]
  %v150 = vld [vmem:[%s1 + $0x190] sm:$0xf]
  %v151 = vld [vmem:[%s1 + $0x194] sm:$0xf]
  %v152 = vld [vmem:[%s1 + $0x198] sm:$0xf]
  %v153 = vld [vmem:[%s1 + $0x19c] sm:$0xf]
  %v154 = vld [vmem:[%s1 + $0x1a0] sm:$0xf]
  %v155 = vld [vmem:[%s1 + $0x1a4] sm:$0xf]
  %v156 = vld [vmem:[%s1 + $0x1a8] sm:$0xf]
  %v157 = vld [vmem:[%s1 + $0x1ac] sm:$0xf]
  %v158 = vld [vmem:[%s1 + $0x1b0] sm:$0xf]
  %v159 = vld [vmem:[%s1 + $0x1b4] sm:$0xf]
  %v160 = vld [vmem:[%s1 + $0x1b8] sm:$0xf]
  %v161 = vld [vmem:[%s1 + $0x1bc] sm:$0xf]
  %v162 = vld [vmem:[%s1 + $0x1c0] sm:$0xf]
  %v163 = vld [vmem:[%s1 + $0x1c4] sm:$0xf]
  %v164 = vld [vmem:[%s1 + $0x1c8] sm:$0xf]
  %v165 = vld [vmem:[%s1 + $0x1cc] sm:$0xf]
  %v166 = vld [vmem:[%s1 + $0x1d0] sm:$0xf]
  %v167 = vld [vmem:[%s1 + $0x1d4] sm:$0xf]
  %v168 = vld [vmem:[%s1 + $0x1d8] sm:$0xf]
  %v169 = vld [vmem:[%s1 + $0x1dc] sm:$0xf]
  %v170 = vld [vmem:[%s1 + $0x1e0] sm:$0xf]
  %v171 = vld [vmem:[%s1 + $0x1e4] sm:$0xf]
  %v172 = vld [vmem:[%s1 + $0x1e8] sm:$0xf]
  %v173 = vld [vmem:[%s1 + $0x1ec] sm:$0xf]
  %v174 = vld [vmem:[%s1 + $0x1f0] sm:$0xf]
  %v175 = vld [vmem:[%s1 + $0x1f4] sm:$0xf]
  %v176 = vld [vmem:[%s1 + $0x1f8] sm:$0xf]
  %v177 = vld [vmem:[%s1 + $0x1fc] sm:$0xf]
  %v178 = vld [vmem:[%s2] sm:$0x1]
  %v180 = vperm.slane %v178, 0
  %v310 = vunpack.c.l.b16 %v50
  %v311 = vunpack.c.l.b16 %v51
  %v312 = vunpack.c.l.b16 %v52
  %v313 = vunpack.c.l.b16 %v53
  %v314 = vunpack.c.l.b16 %v54
  %v315 = vunpack.c.l.b16 %v55
  %v316 = vunpack.c.l.b16 %v56
  %v317 = vunpack.c.l.b16 %v57
  %v318 = vunpack.c.l.b16 %v58
  %v319 = vunpack.c.l.b16 %v59
  %v320 = vunpack.c.l.b16 %v60
  %v321 = vunpack.c.l.b16 %v61
  %v322 = vunpack.c.l.b16 %v62
  %v323 = vunpack.c.l.b16 %v63
  %v324 = vunpack.c.l.b16 %v64
  %v325 = vunpack.c.l.b16 %v65
  %v326 = vunpack.c.l.b16 %v66
  %v327 = vunpack.c.l.b16 %v67
  %v328 = vunpack.c.l.b16 %v68
  %v329 = vunpack.c.l.b16 %v69
  %v330 = vunpack.c.l.b16 %v70
  %v331 = vunpack.c.l.b16 %v71
  %v332 = vunpack.c.l.b16 %v72
  %v333 = vunpack.c.l.b16 %v73
  %v334 = vunpack.c.l.b16 %v74
  %v335 = vunpack.c.l.b16 %v75
  %v336 = vunpack.c.l.b16 %v76
  %v337 = vunpack.c.l.b16 %v77
  %v338 = vunpack.c.l.b16 %v78
  %v339 = vunpack.c.l.b16 %v79
  %v340 = vunpack.c.l.b16 %v80
  %v341 = vunpack.c.l.b16 %v81
  %v342 = vunpack.c.l.b16 %v82
  %v343 = vunpack.c.l.b16 %v83
  %v344 = vunpack.c.l.b16 %v84
  %v345 = vunpack.c.l.b16 %v85
  %v346 = vunpack.c.l.b16 %v86
  %v347 = vunpack.c.l.b16 %v87
  %v348 = vunpack.c.l.b16 %v88
  %v349 = vunpack.c.l.b16 %v89
  %v350 = vunpack.c.l.b16 %v90
  %v351 = vunpack.c.l.b16 %v91
  %v352 = vunpack.c.l.b16 %v92
  %v353 = vunpack.c.l.b16 %v93
  %v354 = vunpack.c.l.b16 %v94
  %v355 = vunpack.c.l.b16 %v95
  %v356 = vunpack.c.l.b16 %v96
  %v357 = vunpack.c.l.b16 %v97
  %v358 = vunpack.c.l.b16 %v98
  %v359 = vunpack.c.l.b16 %v99
  %v360 = vunpack.c.l.b16 %v100
  %v361 = vunpack.c.l.b16 %v101
  %v362 = vunpack.c.l.b16 %v102
  %v363 = vunpack.c.l.b16 %v103
  %v364 = vunpack.c.l.b16 %v104
  %v365 = vunpack.c.l.b16 %v105
  %v366 = vunpack.c.l.b16 %v106
  %v367 = vunpack.c.l.b16 %v107
  %v368 = vunpack.c.l.b16 %v108
  %v369 = vunpack.c.l.b16 %v109
  %v370 = vunpack.c.l.b16 %v110
  %v371 = vunpack.c.l.b16 %v111
  %v372 = vunpack.c.l.b16 %v112
  %v373 = vunpack.c.l.b16 %v113
  %v374 = vunpack.c.l.b16 %v114
  %v375 = vunpack.c.l.b16 %v115
  %v376 = vunpack.c.l.b16 %v116
  %v377 = vunpack.c.l.b16 %v117
  %v378 = vunpack.c.l.b16 %v118
  %v379 = vunpack.c.l.b16 %v119
  %v380 = vunpack.c.l.b16 %v120
  %v381 = vunpack.c.l.b16 %v121
  %v382 = vunpack.c.l.b16 %v122
  %v383 = vunpack.c.l.b16 %v123
  %v384 = vunpack.c.l.b16 %v124
  %v385 = vunpack.c.l.b16 %v125
  %v386 = vunpack.c.l.b16 %v126
  %v387 = vunpack.c.l.b16 %v127
  %v388 = vunpack.c.l.b16 %v128
  %v389 = vunpack.c.l.b16 %v129
  %v390 = vunpack.c.l.b16 %v130
  %v391 = vunpack.c.l.b16 %v131
  %v392 = vunpack.c.l.b16 %v132
  %v393 = vunpack.c.l.b16 %v133
  %v394 = vunpack.c.l.b16 %v134
  %v395 = vunpack.c.l.b16 %v135
  %v396 = vunpack.c.l.b16 %v136
  %v397 = vunpack.c.l.b16 %v137
  %v398 = vunpack.c.l.b16 %v138
  %v399 = vunpack.c.l.b16 %v139
  %v400 = vunpack.c.l.b16 %v140
  %v401 = vunpack.c.l.b16 %v141
  %v402 = vunpack.c.l.b16 %v142
  %v403 = vunpack.c.l.b16 %v143
  %v404 = vunpack.c.l.b16 %v144
  %v405 = vunpack.c.l.b16 %v145
  %v406 = vunpack.c.l.b16 %v146
  %v407 = vunpack.c.l.b16 %v147
  %v408 = vunpack.c.l.b16 %v148
  %v409 = vunpack.c.l.b16 %v149
  %v410 = vunpack.c.l.b16 %v150
  %v411 = vunpack.c.l.b16 %v151
  %v412 = vunpack.c.l.b16 %v152
  %v413 = vunpack.c.l.b16 %v153
  %v414 = vunpack.c.l.b16 %v154
  %v415 = vunpack.c.l.b16 %v155
  %v416 = vunpack.c.l.b16 %v156
  %v417 = vunpack.c.l.b16 %v157
  %v418 = vunpack.c.l.b16 %v158
  %v419 = vunpack.c.l.b16 %v159
  %v420 = vunpack.c.l.b16 %v160
  %v421 = vunpack.c.l.b16 %v161
  %v422 = vunpack.c.l.b16 %v162
  %v423 = vunpack.c.l.b16 %v163
  %v424 = vunpack.c.l.b16 %v164
  %v425 = vunpack.c.l.b16 %v165
  %v426 = vunpack.c.l.b16 %v166
  %v427 = vunpack.c.l.b16 %v167
  %v428 = vunpack.c.l.b16 %v168
  %v429 = vunpack.c.l.b16 %v169
  %v430 = vunpack.c.l.b16 %v170
  %v431 = vunpack.c.l.b16 %v171
  %v432 = vunpack.c.l.b16 %v172
  %v433 = vunpack.c.l.b16 %v173
  %v434 = vunpack.c.l.b16 %v174
  %v435 = vunpack.c.l.b16 %v175
  %v436 = vunpack.c.l.b16 %v176
  %v437 = vunpack.c.l.b16 %v177
  %v438 = vpack.c.b16 %v311, %v310
  %v439 = vpack.c.b16 %v313, %v312
  %v440 = vpack.c.b16 %v315, %v314
  %v441 = vpack.c.b16 %v317, %v316
  %v442 = vpack.c.b16 %v319, %v318
  %v443 = vpack.c.b16 %v321, %v320
  %v444 = vpack.c.b16 %v323, %v322
  %v445 = vpack.c.b16 %v325, %v324
  %v446 = vpack.c.b16 %v327, %v326
  %v447 = vpack.c.b16 %v329, %v328
  %v448 = vpack.c.b16 %v331, %v330
  %v449 = vpack.c.b16 %v333, %v332
  %v450 = vpack.c.b16 %v335, %v334
  %v451 = vpack.c.b16 %v337, %v336
  %v452 = vpack.c.b16 %v339, %v338
  %v453 = vpack.c.b16 %v341, %v340
  %v454 = vpack.c.b16 %v343, %v342
  %v455 = vpack.c.b16 %v345, %v344
  %v456 = vpack.c.b16 %v347, %v346
  %v457 = vpack.c.b16 %v349, %v348
  %v458 = vpack.c.b16 %v351, %v350
  %v459 = vpack.c.b16 %v353, %v352
  %v460 = vpack.c.b16 %v355, %v354
  %v461 = vpack.c.b16 %v357, %v356
  %v462 = vpack.c.b16 %v359, %v358
  %v463 = vpack.c.b16 %v361, %v360
  %v464 = vpack.c.b16 %v363, %v362
  %v465 = vpack.c.b16 %v365, %v364
  %v466 = vpack.c.b16 %v367, %v366
  %v467 = vpack.c.b16 %v369, %v368
  %v468 = vpack.c.b16 %v371, %v370
  %v469 = vpack.c.b16 %v373, %v372
  %v470 = vpack.c.b16 %v375, %v374
  %v471 = vpack.c.b16 %v377, %v376
  %v472 = vpack.c.b16 %v379, %v378
  %v473 = vpack.c.b16 %v381, %v380
  %v474 = vpack.c.b16 %v383, %v382
  %v475 = vpack.c.b16 %v385, %v384
  %v476 = vpack.c.b16 %v387, %v386
  %v477 = vpack.c.b16 %v389, %v388
  %v478 = vpack.c.b16 %v391, %v390
  %v479 = vpack.c.b16 %v393, %v392
  %v480 = vpack.c.b16 %v395, %v394
  %v481 = vpack.c.b16 %v397, %v396
  %v482 = vpack.c.b16 %v399, %v398
  %v483 = vpack.c.b16 %v401, %v400
  %v484 = vpack.c.b16 %v403, %v402
  %v485 = vpack.c.b16 %v405, %v404
  %v486 = vpack.c.b16 %v407, %v406
  %v487 = vpack.c.b16 %v409, %v408
  %v488 = vpack.c.b16 %v411, %v410
  %v489 = vpack.c.b16 %v413, %v412
  %v490 = vpack.c.b16 %v415, %v414
  %v491 = vpack.c.b16 %v417, %v416
  %v492 = vpack.c.b16 %v419, %v418
  %v493 = vpack.c.b16 %v421, %v420
  %v494 = vpack.c.b16 %v423, %v422
  %v495 = vpack.c.b16 %v425, %v424
  %v496 = vpack.c.b16 %v427, %v426
  %v497 = vpack.c.b16 %v429, %v428
  %v498 = vpack.c.b16 %v431, %v430
  %v499 = vpack.c.b16 %v433, %v432
  %v500 = vpack.c.b16 %v435, %v434
  %v501 = vpack.c.b16 %v437, %v436
  %566 = vmatpush.bf16.msra.mxu0 %v445
  %567 = vmatpush.bf16.msra.mxu0 %v444
  %568 = vmatpush.bf16.msra.mxu0 %v443
  %569 = vmatpush.bf16.msra.mxu0 %v442
  %570 = vmatpush.bf16.msra.mxu0 %v441
  %571 = vmatpush.bf16.msra.mxu0 %v440
  %572 = vmatpush.bf16.msra.mxu0 %v439
  %573 = vmatpush.bf16.msra.mxu0 %v438
  %574 = vmatmul.bf16.gmra.mxu0 %v42
  %v575 = vpop.f32.mrf.mxu0
  %v576 = vadd.f32 %v180, %v575
  %v577 = vpop.f32.mrf.mxu0
  %v578 = vadd.f32 %v180, %v577
  %579 = vdwg.mxu0
  %580 = vmatpush.bf16.msra.mxu0 %v453
  %581 = vmatpush.bf16.msra.mxu0 %v452
  %582 = vmatpush.bf16.msra.mxu0 %v451
  %583 = vmatpush.bf16.msra.mxu0 %v450
  %584 = vmatpush.bf16.msra.mxu0 %v449
  %585 = vmatpush.bf16.msra.mxu0 %v448
  %586 = vmatpush.bf16.msra.mxu0 %v447
  %587 = vmatpush.bf16.msra.mxu0 %v446
  %588 = vmatmul.bf16.gmra.mxu0 %v43
  %v589 = vpop.f32.mrf.mxu0
  %v590 = vadd.f32 %v576, %v589
  %v591 = vpop.f32.mrf.mxu0
  %v592 = vadd.f32 %v578, %v591
  %593 = vdwg.mxu0
  %594 = vmatpush.bf16.msra.mxu0 %v461
  %595 = vmatpush.bf16.msra.mxu0 %v460
  %596 = vmatpush.bf16.msra.mxu0 %v459
  %597 = vmatpush.bf16.msra.mxu0 %v458
  %598 = vmatpush.bf16.msra.mxu0 %v457
  %599 = vmatpush.bf16.msra.mxu0 %v456
  %600 = vmatpush.bf16.msra.mxu0 %v455
  %601 = vmatpush.bf16.msra.mxu0 %v454
  %602 = vmatmul.bf16.gmra.mxu0 %v44
  %v603 = vpop.f32.mrf.mxu0
  %v604 = vadd.f32 %v590, %v603
  %v605 = vpop.f32.mrf.mxu0
  %v606 = vadd.f32 %v592, %v605
  %607 = vdwg.mxu0
  %608 = vmatpush.bf16.msra.mxu0 %v469
  %609 = vmatpush.bf16.msra.mxu0 %v468
  %610 = vmatpush.bf16.msra.mxu0 %v467
  %611 = vmatpush.bf16.msra.mxu0 %v466
  %612 = vmatpush.bf16.msra.mxu0 %v465
  %613 = vmatpush.bf16.msra.mxu0 %v464
  %614 = vmatpush.bf16.msra.mxu0 %v463
  %615 = vmatpush.bf16.msra.mxu0 %v462
  %616 = vmatmul.bf16.gmra.mxu0 %v45
  %v617 = vpop.f32.mrf.mxu0
  %v618 = vadd.f32 %v604, %v617
  %v619 = vpop.f32.mrf.mxu0
  %v620 = vadd.f32 %v606, %v619
  %621 = vdwg.mxu0
  %622 = vmatpush.bf16.msra.mxu0 %v477
  %623 = vmatpush.bf16.msra.mxu0 %v476
  %624 = vmatpush.bf16.msra.mxu0 %v475
  %625 = vmatpush.bf16.msra.mxu0 %v474
  %626 = vmatpush.bf16.msra.mxu0 %v473
  %627 = vmatpush.bf16.msra.mxu0 %v472
  %628 = vmatpush.bf16.msra.mxu0 %v471
  %629 = vmatpush.bf16.msra.mxu0 %v470
  %630 = vmatmul.bf16.gmra.mxu0 %v46
  %v631 = vpop.f32.mrf.mxu0
  %v632 = vadd.f32 %v618, %v631
  %v633 = vpop.f32.mrf.mxu0
  %v634 = vadd.f32 %v620, %v633
  %635 = vdwg.mxu0
  %636 = vmatpush.bf16.msra.mxu0 %v485
  %637 = vmatpush.bf16.msra.mxu0 %v484
  %638 = vmatpush.bf16.msra.mxu0 %v483
  %639 = vmatpush.bf16.msra.mxu0 %v482
  %640 = vmatpush.bf16.msra.mxu0 %v481
  %641 = vmatpush.bf16.msra.mxu0 %v480
  %642 = vmatpush.bf16.msra.mxu0 %v479
  %643 = vmatpush.bf16.msra.mxu0 %v478
  %644 = vmatmul.bf16.gmra.mxu0 %v47
  %v645 = vpop.f32.mrf.mxu0
  %v646 = vadd.f32 %v632, %v645
  %v647 = vpop.f32.mrf.mxu0
  %v648 = vadd.f32 %v634, %v647
  %649 = vdwg.mxu0
  %650 = vmatpush.bf16.msra.mxu0 %v493
  %651 = vmatpush.bf16.msra.mxu0 %v492
  %652 = vmatpush.bf16.msra.mxu0 %v491
  %653 = vmatpush.bf16.msra.mxu0 %v490
  %654 = vmatpush.bf16.msra.mxu0 %v489
  %655 = vmatpush.bf16.msra.mxu0 %v488
  %656 = vmatpush.bf16.msra.mxu0 %v487
  %657 = vmatpush.bf16.msra.mxu0 %v486
  %658 = vmatmul.bf16.gmra.mxu0 %v48
  %v659 = vpop.f32.mrf.mxu0
  %v660 = vadd.f32 %v646, %v659
  %v661 = vpop.f32.mrf.mxu0
  %v662 = vadd.f32 %v648, %v661
  %663 = vdwg.mxu0
  %664 = vmatpush.bf16.msra.mxu0 %v501
  %665 = vmatpush.bf16.msra.mxu0 %v500
  %666 = vmatpush.bf16.msra.mxu0 %v499
  %667 = vmatpush.bf16.msra.mxu0 %v498
  %668 = vmatpush.bf16.msra.mxu0 %v497
  %669 = vmatpush.bf16.msra.mxu0 %v496
  %670 = vmatpush.bf16.msra.mxu0 %v495
  %671 = vmatpush.bf16.msra.mxu0 %v494
  %672 = vmatmul.bf16.gmra.mxu0 %v49
  %v673 = vpop.f32.mrf.mxu0
  %v674 = vadd.f32 %v660, %v673
  %v675 = vpop.f32.mrf.mxu0
  %v676 = vadd.f32 %v662, %v675
  %677 = vdwg.mxu0
  %v678 = vmax.f32 %v674, 0.0
  %v679 = vmax.f32 %v676, 0.0
  %v680 = vpack.c.bf16 %v679, %v678
  %v681 = vld [vmem:[%s3] sm:$0xf]
  %v682 = vld [vmem:[%s3 + $0x4] sm:$0xf]
  %v683 = vld [vmem:[%s3 + $0x8] sm:$0xf]
  %v684 = vld [vmem:[%s3 + $0xc] sm:$0xf]
  %v685 = vld [vmem:[%s3 + $0x10] sm:$0xf]
  %v686 = vld [vmem:[%s3 + $0x14] sm:$0xf]
  %v687 = vld [vmem:[%s3 + $0x18] sm:$0xf]
  %v688 = vld [vmem:[%s3 + $0x1c] sm:$0xf]
  %v689 = vld [vmem:[%s3 + $0x20] sm:$0xf]
  %v690 = vld [vmem:[%s3 + $0x24] sm:$0xf]
  %v691 = vld [vmem:[%s3 + $0x28] sm:$0xf]
  %v692 = vld [vmem:[%s3 + $0x2c] sm:$0xf]
  %v693 = vld [vmem:[%s3 + $0x30] sm:$0xf]
  %v694 = vld [vmem:[%s3 + $0x34] sm:$0xf]
  %v695 = vld [vmem:[%s3 + $0x38] sm:$0xf]
  %v696 = vld [vmem:[%s3 + $0x3c] sm:$0xf]
  %v697 = vld [vmem:[%s4] sm:$0x1]
  %v699 = vperm.slane %v697, 0
  %v717 = vunpack.c.l.b16 %v681
  %v718 = vunpack.c.l.b16 %v682
  %v719 = vunpack.c.l.b16 %v683
  %v720 = vunpack.c.l.b16 %v684
  %v721 = vunpack.c.l.b16 %v685
  %v722 = vunpack.c.l.b16 %v686
  %v723 = vunpack.c.l.b16 %v687
  %v724 = vunpack.c.l.b16 %v688
  %v725 = vunpack.c.l.b16 %v689
  %v726 = vunpack.c.l.b16 %v690
  %v727 = vunpack.c.l.b16 %v691
  %v728 = vunpack.c.l.b16 %v692
  %v729 = vunpack.c.l.b16 %v693
  %v730 = vunpack.c.l.b16 %v694
  %v731 = vunpack.c.l.b16 %v695
  %v732 = vunpack.c.l.b16 %v696
  %v733 = vpack.c.b16 %v718, %v717
  %v734 = vpack.c.b16 %v720, %v719
  %v735 = vpack.c.b16 %v722, %v721
  %v736 = vpack.c.b16 %v724, %v723
  %v737 = vpack.c.b16 %v726, %v725
  %v738 = vpack.c.b16 %v728, %v727
  %v739 = vpack.c.b16 %v730, %v729
  %v740 = vpack.c.b16 %v732, %v731
  %749 = vmatpush.bf16.msra.mxu0 %v740
  %750 = vmatpush.bf16.msra.mxu0 %v739
  %751 = vmatpush.bf16.msra.mxu0 %v738
  %752 = vmatpush.bf16.msra.mxu0 %v737
  %753 = vmatpush.bf16.msra.mxu0 %v736
  %754 = vmatpush.bf16.msra.mxu0 %v735
  %755 = vmatpush.bf16.msra.mxu0 %v734
  %756 = vmatpush.bf16.msra.mxu0 %v733
  %757 = vmatmul.bf16.gmra.mxu0 %v680
  %v758 = vpop.f32.mrf.mxu0
  %v759 = vadd.f32 %v699, %v758
  %v760 = vpop.f32.mrf.mxu0
  %v761 = vadd.f32 %v699, %v760
  %762 = vdwg.mxu0
  %v763 = vmax.f32 %v759, 0.0
  %v764 = vmax.f32 %v761, 0.0
  %v765 = vpack.c.bf16 %v764, %v763
  %v766 = vld [vmem:[%s5] sm:$0xf]
  %v767 = vld [vmem:[%s5 + $0x4] sm:$0xf]
  %v768 = vld [vmem:[%s5 + $0x8] sm:$0xf]
  %v769 = vld [vmem:[%s5 + $0xc] sm:$0xf]
  %v770 = vld [vmem:[%s5 + $0x10] sm:$0xf]
  %v771 = vld [vmem:[%s5 + $0x14] sm:$0xf]
  %v772 = vld [vmem:[%s5 + $0x18] sm:$0xf]
  %v773 = vld [vmem:[%s5 + $0x1c] sm:$0xf]
  %v774 = vld [vmem:[%s5 + $0x20] sm:$0xf]
  %v775 = vld [vmem:[%s5 + $0x24] sm:$0xf]
  %v776 = vld [vmem:[%s5 + $0x28] sm:$0xf]
  %v777 = vld [vmem:[%s5 + $0x2c] sm:$0xf]
  %v778 = vld [vmem:[%s5 + $0x30] sm:$0xf]
  %v779 = vld [vmem:[%s5 + $0x34] sm:$0xf]
  %v780 = vld [vmem:[%s5 + $0x38] sm:$0xf]
  %v781 = vld [vmem:[%s5 + $0x3c] sm:$0xf]
  %v782 = vld [vmem:[%s6] sm:$0x1]
  %v784 = vperm.slane %v782, 0
  %v802 = vunpack.c.l.b16 %v766
  %v803 = vunpack.c.l.b16 %v767
  %v804 = vunpack.c.l.b16 %v768
  %v805 = vunpack.c.l.b16 %v769
  %v806 = vunpack.c.l.b16 %v770
  %v807 = vunpack.c.l.b16 %v771
  %v808 = vunpack.c.l.b16 %v772
  %v809 = vunpack.c.l.b16 %v773
  %v810 = vunpack.c.l.b16 %v774
  %v811 = vunpack.c.l.b16 %v775
  %v812 = vunpack.c.l.b16 %v776
  %v813 = vunpack.c.l.b16 %v777
  %v814 = vunpack.c.l.b16 %v778
  %v815 = vunpack.c.l.b16 %v779
  %v816 = vunpack.c.l.b16 %v780
  %v817 = vunpack.c.l.b16 %v781
  %v818 = vpack.c.b16 %v803, %v802
  %v819 = vpack.c.b16 %v805, %v804
  %v820 = vpack.c.b16 %v807, %v806
  %v821 = vpack.c.b16 %v809, %v808
  %v822 = vpack.c.b16 %v811, %v810
  %v823 = vpack.c.b16 %v813, %v812
  %v824 = vpack.c.b16 %v815, %v814
  %v825 = vpack.c.b16 %v817, %v816
  %834 = vmatpush.bf16.msra.mxu0 %v825
  %835 = vmatpush.bf16.msra.mxu0 %v824
  %836 = vmatpush.bf16.msra.mxu0 %v823
  %837 = vmatpush.bf16.msra.mxu0 %v822
  %838 = vmatpush.bf16.msra.mxu0 %v821
  %839 = vmatpush.bf16.msra.mxu0 %v820
  %840 = vmatpush.bf16.msra.mxu0 %v819
  %841 = vmatpush.bf16.msra.mxu0 %v818
  %842 = vmatmul.bf16.gmra.mxu0 %v765
  %v843 = vpop.f32.mrf.mxu0
  %v844 = vadd.f32 %v784, %v843
  %v845 = vpop.f32.mrf.mxu0
  %v846 = vadd.f32 %v784, %v845
  %847 = vdwg.mxu0
  %v848 = vpack.c.bf16 %v844, %v844
  %v849 = vpack.c.bf16 %v846, %v846
  %850 = vst [vmem:[%s7] sm:$0xf] %v848
  %851 = vst [vmem:[%s7 + $0x4] sm:$0xf] %v849
  // Predicated region
  $region30: #{ffnn_forward.1} parent=0 // pred_check
    _
  $region31: #{ffnn_forward.1} parent=0 // pred_check_branch
    %853 = sbr.rel (0) target = $region33
  $region32: #{ffnn_forward.1} parent=0 // pred_region
    _
  $region33: #{ffnn_forward.1} parent=0 // pred_fallthru
    _
  // Predicated region
  $region34: #{ffnn_forward.1} parent=0 // pred_check
    _
  $region35: #{ffnn_forward.1} parent=0 // pred_check_branch
    %855 = sbr.rel (0) target = $region37
  $region36: #{ffnn_forward.1} parent=0 // pred_region
    _
  $region37: #{ffnn_forward.1} parent=0 // pred_fallthru
    _

</llo_original>
